<compile_context>
chip_gen: v6e
topology: v6e:2x2x1
jax: 0.10.0
libtpu: 0.0.40
codegen_flags: <defaults>
</compile_context>

<pallas_src>
import jax
import jax.numpy as jnp
from jax.experimental import pallas as pl
from jax.experimental.pallas import tpu as pltpu


_SUBLANE = {4: 8, 2: 16, 1: 32}       # sublane packing per itemsize
_SMALL_INPUT_BYTES = 1 << 20          # below this, XLA softmax wins outright


def _physical_vmem_bytes():
    try:
        return int(pltpu.get_tpu_info().vmem_capacity_bytes)
    except Exception:
        return 64 << 20  # conservative default: v7x per-TensorCore VMEM


def _softmax_kernel(x_ref, y_ref):
    # Row-wise softmax over dim=1 (lane / last axis of the tile), f32 math.
    x = x_ref[...].astype(jnp.float32)
    m = jnp.max(x, axis=1, keepdims=True)
    e = jnp.exp(x - m)
    s = jnp.sum(e, axis=1, keepdims=True)
    # Exact division: the divide is over a (rows, 1) column — negligible work
    # in an HBM-bound kernel, and it keeps rows summing to 1 at f32 accuracy.
    y_ref[...] = (e / s).astype(y_ref.dtype)


def _choose_tiling(N, D, itemsize):
    """Pick a sublane-aligned row-tile height that fits the chip's VMEM budget.

    Returns (block_rows, vmem_limit_bytes), or (None, None) meaning "do not
    use Pallas" (even a minimum-height tile would not fit the budget).
    """
    align = _SUBLANE.get(itemsize, 8)
    phys = _physical_vmem_bytes()
    # Scoped budget with headroom: at most half of physical VMEM, capped at
    # 32 MiB (portable across v5e/v6e/v7x; raised via vmem_limit_bytes).
    budget = min(phys // 2, 32 << 20)

    # Per-row VMEM cost:
    #   2 x (input tile + output tile) for double-buffering
    # + 2 x full-tile f32 intermediates (f32 upcast of x, and e = exp(x - m)).
    per_row = 2 * 2 * D * itemsize + 2 * D * 4
    rows_fit = budget // per_row
    if rows_fit < align:
        return None, None  # gigantic D: fall back to plain XLA softmax

    # Chip-conditional per-input-buffer tile cap: keep tiles small on v7x's
    # 64 MiB VMEM so double-buffering + f32 temps always fit; 8 MiB tiles are
    # already ~85-86% of HBM roofline on 128 MiB chips.
    tile_cap = (4 << 20) if phys <= (64 << 20) else (8 << 20)
    rows_cap = max(align, tile_cap // (D * itemsize))

    block_rows = min(N, rows_fit, rows_cap)
    if block_rows < N:
        block_rows = max(align, (block_rows // align) * align)
    elif N >= 4 * align:
        # Whole array would fit in one tile: force >= 4 grid steps so the
        # input-prefetch / output-writeback pipeline reaches steady state
        # (and v7x megacore gets >= 2 steps per TensorCore). Tiny arrays are
        # already filtered out by the small-input fallback in cdn_forward.
        target = pl.cdiv(N, 4)
        block_rows = ((target + align - 1) // align) * align
        block_rows = min(block_rows, max(align, (rows_fit // align) * align))

    vmem_limit = min(phys, max(block_rows * per_row + (2 << 20), 16 << 20))
    return int(block_rows), int(vmem_limit)


def cdn_forward(X, params=None):
    """Pallas implementation of CDN.forward: returns (softmax(X, dim=1), X).

    `params` (the unused fc/norm weights) is accepted for signature fidelity
    but — exactly like the PyTorch module — never touches the output.
    """
    N, D = X.shape
    itemsize = jnp.dtype(X.dtype).itemsize
    total_bytes = N * D * itemsize

    # Fallbacks where the Pallas launch cannot pay for itself:
    #  * tiny inputs (launch + DMA prologue dominates, XLA softmax is fused),
    #  * lane-sparse feature dims (most of every vreg / HBM transaction is
    #    masked) — but large non-multiple-of-128 D (>= 512) stays on Pallas
    #    with a full-D block (only trailing partial-vreg columns are masked).
    lane_dense = (D % 128 == 0)
    if D < 128 or not (lane_dense or D >= 512) or total_bytes < _SMALL_INPUT_BYTES:
        return jax.nn.softmax(X, axis=1), X

    block_rows, vmem_limit = _choose_tiling(N, D, itemsize)
    if block_rows is None:
        return jax.nn.softmax(X, axis=1), X

    grid = (pl.cdiv(N, block_rows),)
    X1 = pl.pallas_call(
        _softmax_kernel,
        out_shape=jax.ShapeDtypeStruct((N, D), X.dtype),
        grid_spec=pltpu.PrefetchScalarGridSpec(
            num_scalar_prefetch=0,
            grid=grid,
            in_specs=[pl.BlockSpec((block_rows, D), lambda i: (i, 0))],
            out_specs=pl.BlockSpec((block_rows, D), lambda i: (i, 0)),
        ),
        compiler_params=pltpu.CompilerParams(
            dimension_semantics=("parallel",),
            vmem_limit_bytes=vmem_limit,
        ),
    )(X)
    return X1, X


def init_cdn_params(key, dim_in, dim_out):
    """Deterministic init of the (unused-in-forward) CDN parameters."""
    k1, k2, k3, k4 = jax.random.split(key, 4)
    return {
        # nn.BatchNorm1d(dim_in)
        "norm1": {"gamma": jnp.ones((dim_in,), jnp.float32),
                  "beta": jnp.zeros((dim_in,), jnp.float32),
                  "running_mean": jnp.zeros((dim_in,), jnp.float32),
                  "running_var": jnp.ones((dim_in,), jnp.float32)},
        # nn.Linear(dim_in, dim_in)
        "fc1": {"weight": jax.random.normal(k1, (dim_in, dim_in), jnp.float32) * 0.02,
                "bias": jax.random.normal(k2, (dim_in,), jnp.float32) * 0.02},
        # nn.BatchNorm1d(dim_in)
        "norm2": {"gamma": jnp.ones((dim_in,), jnp.float32),
                  "beta": jnp.zeros((dim_in,), jnp.float32),
                  "running_mean": jnp.zeros((dim_in,), jnp.float32),
                  "running_var": jnp.ones((dim_in,), jnp.float32)},
        # nn.Linear(dim_in, dim_out)
        "fc2": {"weight": jax.random.normal(k3, (dim_out, dim_in), jnp.float32) * 0.02,
                "bias": jax.random.normal(k4, (dim_out,), jnp.float32) * 0.02},
        # nn.BatchNorm1d(dim_out)
        "norm3": {"gamma": jnp.ones((dim_out,), jnp.float32),
                  "beta": jnp.zeros((dim_out,), jnp.float32),
                  "running_mean": jnp.zeros((dim_out,), jnp.float32),
                  "running_var": jnp.ones((dim_out,), jnp.float32)},
        # nn.Dropout(0.003) has no parameters; unused in forward.
    }


if __name__ == "__main__":
    key = jax.random.PRNGKey(0)
    k_x, k_p, k_x2 = jax.random.split(key, 3)

    # Lane-dense shape (D multiple of 128), large enough (2 MiB f32) to clear
    # the small-input fallback so the Pallas path runs with >= 4 grid steps.
    batch, dim_in, dim_out = 2048, 256, 128
    X = jax.random.normal(k_x, (batch, dim_in), dtype=jnp.float32)
    params = init_cdn_params(k_p, dim_in, dim_out)  # unused in forward (matches PyTorch)

    X1, X_out = cdn_forward(X, params)
    jax.block_until_ready((X1, X_out))

    ref = jax.nn.softmax(X, axis=1)
    assert jnp.allclose(X1, ref, atol=1e-6, rtol=1e-5), "softmax mismatch (pallas path)"
    assert jnp.allclose(jnp.sum(X1, axis=1), 1.0, atol=1e-5), "softmax rows do not sum to 1"
    assert jnp.array_equal(X_out, X), "passthrough mismatch"

    # Tiny / lane-sparse feature dim: exercises the jax.nn.softmax fallback.
    X_small = jax.random.normal(k_x2, (8, 32), dtype=jnp.float32)
    X1s, Xs_out = cdn_forward(X_small)
    jax.block_until_ready((X1s, Xs_out))
    assert jnp.allclose(X1s, jax.nn.softmax(X_small, axis=1), atol=1e-6, rtol=1e-6)
    assert jnp.array_equal(Xs_out, X_small)

    print("KERNEL_OK")
</pallas_src>

<mosaic_0001>
module attributes {stable_mosaic.version = 11 : i64} {
  func.func @_softmax_kernel(%arg0: i32, %arg1: memref<512x256xf32, #tpu.memory_space<vmem>>, %arg2: memref<512x256xf32, #tpu.memory_space<vmem>>) attributes {dimension_semantics = [#tpu.dimension_semantics<parallel>], iteration_bounds = array<i64: 4>, scalar_prefetch = 0 : i64, scratch_operands = 0 : i64, tpu.core_type = #tpu.core_type<tc>, window_params = [{transform_indices = @transform_0, window_bounds = array<i64: 512, 256>}, {transform_indices = @transform_1, window_bounds = array<i64: 512, 256>}]} {
    %c0 = arith.constant 0 : index
    %c0_0 = arith.constant 0 : index
    %0 = vector.load %arg1[%c0, %c0_0] : memref<512x256xf32, #tpu.memory_space<vmem>>, vector<512x256xf32>
    %cst = arith.constant dense<0xFF800000> : vector<512xf32>
    %1 = vector.multi_reduction <maximumf>, %0, %cst [1] : vector<512x256xf32> to vector<512xf32>
    %2 = vector.shape_cast %1 : vector<512xf32> to vector<512x1xf32>
    %3 = vector.broadcast %2 : vector<512x1xf32> to vector<512x256xf32>
    %4 = arith.subf %0, %3 : vector<512x256xf32>
    %5 = math.exp %4 : vector<512x256xf32>
    %cst_1 = arith.constant dense<0.000000e+00> : vector<512xf32>
    %6 = vector.multi_reduction <add>, %5, %cst_1 [1] : vector<512x256xf32> to vector<512xf32>
    %7 = vector.shape_cast %6 : vector<512xf32> to vector<512x1xf32>
    %8 = vector.broadcast %7 : vector<512x1xf32> to vector<512x256xf32>
    %9 = arith.divf %5, %8 : vector<512x256xf32>
    %c0_2 = arith.constant 0 : index
    %c0_3 = arith.constant 0 : index
    %10 = vector.load %arg2[%c0_2, %c0_3] : memref<512x256xf32, #tpu.memory_space<vmem>>, vector<512x256xf32>
    tpu.vector_store %arg2[%c0_2, %c0_3], %9 {strides = array<i32>} : memref<512x256xf32, #tpu.memory_space<vmem>>, vector<512x256xf32>,
    return
  }
  func.func @transform_0(%arg0: i32) -> (i32, i32) {
    %c0_i32 = arith.constant 0 : i32
    %c0_i32_0 = arith.constant 0 : i32
    return %arg0, %c0_i32 : i32, i32
  }
  func.func @transform_1(%arg0: i32) -> (i32, i32) {
    %c0_i32 = arith.constant 0 : i32
    %c0_i32_0 = arith.constant 0 : i32
    return %arg0, %c0_i32 : i32, i32
  }
}

</mosaic_0001>

<llo_original>
// kernel: tpu_custom_call.1
$region0: #{tpu_custom_call.1}
  #allocation0 [shape = 'u32[]', space=smem, size = 0x4, offset = 0x4, fixed_abs, tag = 'smem constant byte address 0x4 - core index']
  #allocation1 [shape = 'u32[144,128]{1,0:T(1,128)}', space=vmem, size = 0x12000, scoped, tag = 'internal scratch']
  %s0 = inlined_call_operand.hbm [shape: f32[2048,256], index: 0, kind: input, shape index: {}]
  %s1 = inlined_call_operand.hbm [shape: f32[2048,256], index: 1, kind: output, shape index: {}]
  %s2 = sld [smem:[#allocation0]]
  $region41: #{tpu_custom_call.1} parent=0
    _
  %s4 = ssub.s32 1, %s2
  %s5 = scalar_select 0, %s4, %s2
  $region1: #{tpu_custom_call.1} parent=0
    #allocation2 [shape = 'u8[1048576]{0}', space=vmem, size = 0x100000, scoped, tag = 'input window, operand 0']
    #allocation3 [shape = 's32[2]{0}', space=sflag, size = 0x8, scoped, tag = 'scoped memory for tpu_custom_call.1']
    #allocation4 [shape = 's32[2]{0}', space=sflag, size = 0x8, scoped, tag = 'scoped memory for tpu_custom_call.1']
    #allocation5 [shape = 'u8[1048576]{0}', space=vmem, size = 0x100000, scoped, tag = 'output window, operand 0']
    %6 = vsyncpa [#allocation3], 0
    %s7 = scalar_lea.sflag [#allocation3], 1
    %8 = vsyncpa %s7, 0
    %9 = vsyncpa [#allocation4], 0
    %s10 = scalar_lea.sflag [#allocation4], 1
    %11 = vsyncpa %s10, 0
    loop: start=0, step=1, limit=6
    $region2: #{tpu_custom_call.1} parent=1 // loop_pre_header
      _
    $region3: #{tpu_custom_call.1} parent=1 // loop_header
      %s13 = sphi 0, %s17
      %p14 = scmp.ge.s32.totalorder %s13, 6
      %s23 = sphi 0, %s25
      %s26 = sphi 0, %s23
      %s27 = sphi 0, %s26
      %s43 = sphi 0, %s27
      %s49 = sphi 0, %s51
      %s52 = sphi 0, %s49
      %s53 = sphi 0, %s52
      %s69 = sphi 0, %s53
    $region4: #{tpu_custom_call.1} parent=1 // loop_header_branch
      %16 = sbr.rel (%p14) target = $region8
    $region5: #{tpu_custom_call.1} parent=1 // loop_body
      %s18 = ssub.s32 %s13, 1
      %s19 = ssub.s32 %s13, 2
      %s20 = sadd.s32 %s13, 1
      %s21 = ssub.s32 %s13, %s20
      %p22 = scmp.eq.s32.totalorder %s21, 0
      %s24 = sadd.s32 %s23, 1
      %s25 = scalar_select %p22, %s23, %s24
      %p28 = pneg %p22
      %p29 = scmp.eq.s32.totalorder %s13, 3
      %p30 = por %p28, %p29
      %p31 = scmp.ne.s32.totalorder %s23, %s26
      %p32 = scmp.eq.s32.totalorder %s13, 0
      %p33 = por %p31, %p32
      %p34 = scmp.ne.s32.totalorder %s23, %s26
      %p35 = scmp.eq.s32.totalorder %s18, 3
      %p36 = por %p34, %p35
      %p37 = scmp.ne.s32.totalorder %s26, %s27
      %p38 = scmp.eq.s32.totalorder %s18, 0
      %p39 = por %p37, %p38
      %p40 = scmp.ne.s32.totalorder %s26, %s27
      %p41 = scmp.eq.s32.totalorder %s19, 3
      %p42 = por %p40, %p41
      %p44 = scmp.ne.s32.totalorder %s27, %s43
      %p45 = scmp.eq.s32.totalorder %s19, 0
      %p46 = por %p44, %p45
      %s47 = ssub.s32 %s13, %s20
      %p48 = scmp.eq.s32.totalorder %s47, 0
      %s50 = sadd.s32 %s49, 1
      %s51 = scalar_select %p48, %s49, %s50
      %p54 = pneg %p48
      %p55 = scmp.eq.s32.totalorder %s13, 3
      %p56 = por %p54, %p55
      %p57 = scmp.ne.s32.totalorder %s49, %s52
      %p58 = scmp.eq.s32.totalorder %s13, 0
      %p59 = por %p57, %p58
      %p60 = scmp.ne.s32.totalorder %s49, %s52
      %p61 = scmp.eq.s32.totalorder %s18, 3
      %p62 = por %p60, %p61
      %p63 = scmp.ne.s32.totalorder %s52, %s53
      %p64 = scmp.eq.s32.totalorder %s18, 0
      %p65 = por %p63, %p64
      %p66 = scmp.ne.s32.totalorder %s52, %s53
      %p67 = scmp.eq.s32.totalorder %s19, 3
      %p68 = por %p66, %p67
      %p70 = scmp.ne.s32.totalorder %s53, %s69
      %p71 = scmp.eq.s32.totalorder %s19, 0
      %p72 = por %p70, %p71
      %p73 = scmp.le.s32.totalorder 1, %s13
      %p74 = scmp.lt.s32.totalorder %s13, 5
      %p75 = pnand %p73, %p74
      %p76 = pneg %p75
      // Predicated region
      $region9: #{tpu_custom_call.1} parent=5 // pred_check
        _
      $region10: #{tpu_custom_call.1} parent=5 // pred_check_branch
        %78 = sbr.rel (%p75) target = $region12
      $region11: #{tpu_custom_call.1} parent=5 // pred_region
        %s79 = ssub.s32 %s13, 1
      $region12: #{tpu_custom_call.1} parent=5 // pred_fallthru
        _
      %p80 = scmp.lt.s32.totalorder %s13, 4
      // Predicated region
      $region13: #{tpu_custom_call.1} parent=5 // pred_check
        %p81 = pneg %p80
      $region14: #{tpu_custom_call.1} parent=5 // pred_check_branch
        %83 = sbr.rel (%p81) target = $region16
      $region15: #{tpu_custom_call.1} parent=5 // pred_region
        // Predicated region
        $region17: #{tpu_custom_call.1} parent=15 // pred_check
          %p84 = pneg %p33
        $region18: #{tpu_custom_call.1} parent=15 // pred_check_branch
          %86 = sbr.rel (%p84) target = $region20
        $region19: #{tpu_custom_call.1} parent=15 // pred_region
          %s87 = sand.u32 %s23, 1
          %s88 = scalar_lea.sflag [#allocation3], %s87
          %s89 = sand.u32 %s23, 1
          %s90 = smul.addr %s89, 1024
          %s91 = scalar_lea.vmem [#allocation2], %s90
          %s92 = smul.u32 64, %s13
          %s94 = ssub.s32 16384, 16384
          %95 = vsyncadd %s88, %s94
          %s96 = smul.addr %s92, 2
          %s97 = smul.addr %s96, 128
          %s98 = scalar_lea.hbm %s0, %s97
          %s99 = sshll.u32 %s91, 4
          %s100 = int_to_ptr.vmem [resolvable:$true] %s99
          %105 = dma.hbm_to_vmem [thread:$0]  %s98, 16384, %s100, %s88, 256, 256, 16
        $region20: #{tpu_custom_call.1} parent=15 // pred_fallthru
          _
      $region16: #{tpu_custom_call.1} parent=5 // pred_fallthru
        _
      %p106 = scmp.le.s32.totalorder 1, %s13
      %p107 = scmp.lt.s32.totalorder %s13, 5
      %p108 = pnand %p106, %p107
      %p109 = pneg %p108
      // Predicated region
      $region21: #{tpu_custom_call.1} parent=5 // pred_check
        _
      $region22: #{tpu_custom_call.1} parent=5 // pred_check_branch
        %111 = sbr.rel (%p108) target = $region24
      $region23: #{tpu_custom_call.1} parent=5 // pred_region
        %s112 = ssub.s32 %s13, 1
        %s113 = sand.u32 %s26, 1
        %s114 = scalar_lea.sflag [#allocation3], %s113
        %s115 = sand.u32 %s26, 1
        %s116 = smul.addr %s115, 1024
        %s117 = scalar_lea.vmem [#allocation2], %s116
        // Predicated region
        $region25: #{tpu_custom_call.1} parent=23 // pred_check
          %p118 = pneg %p39
        $region26: #{tpu_custom_call.1} parent=23 // pred_check_branch
          %120 = sbr.rel (%p118) target = $region28
        $region27: #{tpu_custom_call.1} parent=23 // pred_region
          %121 = dma.done %s114, 16384
        $region28: #{tpu_custom_call.1} parent=23 // pred_fallthru
          _
        %s122 = sand.u32 %s26, 1
        %s123 = scalar_lea.sflag [#allocation3], %s122
        %s124 = sand.u32 %s26, 1
        %s125 = smul.addr %s124, 1024
        %s126 = scalar_lea.vmem [#allocation2], %s125
        %p127 = pneg %p39
        %p128 = pneg %p36
        %p129 = pneg %p65
        %p130 = pneg %p62
        %s131 = sand.u32 %s52, 1
        %s132 = scalar_lea.sflag [#allocation4], %s131
        %s133 = sand.u32 %s52, 1
        %s134 = smul.addr %s133, 1024
        %s135 = scalar_lea.vmem [#allocation5], %s134
        %s136 = smul.u32 64, %s18
        %s137 = smul.u32 64, %s18
        %v138 = vld [vmem:[%s117] sm:$0xff]
        %v139 = vld [vmem:[%s117 + $0x8] sm:$0xff]
        %v140 = vld [vmem:[%s117 + $0x10] sm:$0xff]
        %v141 = vld [vmem:[%s117 + $0x18] sm:$0xff]
        %v142 = vld [vmem:[%s117 + $0x20] sm:$0xff]
        %v143 = vld [vmem:[%s117 + $0x28] sm:$0xff]
        %v144 = vld [vmem:[%s117 + $0x30] sm:$0xff]
        %v145 = vld [vmem:[%s117 + $0x38] sm:$0xff]
        %v146 = vld [vmem:[%s117 + $0x40] sm:$0xff]
        %v147 = vld [vmem:[%s117 + $0x48] sm:$0xff]
        %v148 = vld [vmem:[%s117 + $0x50] sm:$0xff]
        %v149 = vld [vmem:[%s117 + $0x58] sm:$0xff]
        %v150 = vld [vmem:[%s117 + $0x60] sm:$0xff]
        %v151 = vld [vmem:[%s117 + $0x68] sm:$0xff]
        %v152 = vld [vmem:[%s117 + $0x70] sm:$0xff]
        %v153 = vld [vmem:[%s117 + $0x78] sm:$0xff]
        %v154 = vld [vmem:[%s117 + $0x80] sm:$0xff]
        %v155 = vld [vmem:[%s117 + $0x88] sm:$0xff]
        %v156 = vld [vmem:[%s117 + $0x90] sm:$0xff]
        %v157 = vld [vmem:[%s117 + $0x98] sm:$0xff]
        %v158 = vld [vmem:[%s117 + $0xa0] sm:$0xff]
        %v159 = vld [vmem:[%s117 + $0xa8] sm:$0xff]
        %v160 = vld [vmem:[%s117 + $0xb0] sm:$0xff]
        %v161 = vld [vmem:[%s117 + $0xb8] sm:$0xff]
        %v162 = vld [vmem:[%s117 + $0xc0] sm:$0xff]
        %v163 = vld [vmem:[%s117 + $0xc8] sm:$0xff]
        %v164 = vld [vmem:[%s117 + $0xd0] sm:$0xff]
        %v165 = vld [vmem:[%s117 + $0xd8] sm:$0xff]
        %v166 = vld [vmem:[%s117 + $0xe0] sm:$0xff]
        %v167 = vld [vmem:[%s117 + $0xe8] sm:$0xff]
        %v168 = vld [vmem:[%s117 + $0xf0] sm:$0xff]
        %v169 = vld [vmem:[%s117 + $0xf8] sm:$0xff]
        %v170 = vld [vmem:[%s117 + $0x100] sm:$0xff]
        %v171 = vld [vmem:[%s117 + $0x108] sm:$0xff]
        %v172 = vld [vmem:[%s117 + $0x110] sm:$0xff]
        %v173 = vld [vmem:[%s117 + $0x118] sm:$0xff]
        %v174 = vld [vmem:[%s117 + $0x120] sm:$0xff]
        %v175 = vld [vmem:[%s117 + $0x128] sm:$0xff]
        %v176 = vld [vmem:[%s117 + $0x130] sm:$0xff]
        %v177 = vld [vmem:[%s117 + $0x138] sm:$0xff]
        %v178 = vld [vmem:[%s117 + $0x140] sm:$0xff]
        %v179 = vld [vmem:[%s117 + $0x148] sm:$0xff]
        %v180 = vld [vmem:[%s117 + $0x150] sm:$0xff]
        %v181 = vld [vmem:[%s117 + $0x158] sm:$0xff]
        %v182 = vld [vmem:[%s117 + $0x160] sm:$0xff]
        %v183 = vld [vmem:[%s117 + $0x168] sm:$0xff]
        %v184 = vld [vmem:[%s117 + $0x170] sm:$0xff]
        %v185 = vld [vmem:[%s117 + $0x178] sm:$0xff]
        %v186 = vld [vmem:[%s117 + $0x180] sm:$0xff]
        %v187 = vld [vmem:[%s117 + $0x188] sm:$0xff]
        %v188 = vld [vmem:[%s117 + $0x190] sm:$0xff]
        %v189 = vld [vmem:[%s117 + $0x198] sm:$0xff]
        %v190 = vld [vmem:[%s117 + $0x1a0] sm:$0xff]
        %v191 = vld [vmem:[%s117 + $0x1a8] sm:$0xff]
        %v192 = vld [vmem:[%s117 + $0x1b0] sm:$0xff]
        %v193 = vld [vmem:[%s117 + $0x1b8] sm:$0xff]
        %v194 = vld [vmem:[%s117 + $0x1c0] sm:$0xff]
        %v195 = vld [vmem:[%s117 + $0x1c8] sm:$0xff]
        %v196 = vld [vmem:[%s117 + $0x1d0] sm:$0xff]
        %v197 = vld [vmem:[%s117 + $0x1d8] sm:$0xff]
        %v198 = vld [vmem:[%s117 + $0x1e0] sm:$0xff]
        %v199 = vld [vmem:[%s117 + $0x1e8] sm:$0xff]
        %v200 = vld [vmem:[%s117 + $0x1f0] sm:$0xff]
        %v201 = vld [vmem:[%s117 + $0x1f8] sm:$0xff]
        %v202 = vld [vmem:[%s117 + $0x200] sm:$0xff]
        %v203 = vld [vmem:[%s117 + $0x208] sm:$0xff]
        %v204 = vld [vmem:[%s117 + $0x210] sm:$0xff]
        %v205 = vld [vmem:[%s117 + $0x218] sm:$0xff]
        %v206 = vld [vmem:[%s117 + $0x220] sm:$0xff]
        %v207 = vld [vmem:[%s117 + $0x228] sm:$0xff]
        %v208 = vld [vmem:[%s117 + $0x230] sm:$0xff]
        %v209 = vld [vmem:[%s117 + $0x238] sm:$0xff]
        %v210 = vld [vmem:[%s117 + $0x240] sm:$0xff]
        %v211 = vld [vmem:[%s117 + $0x248] sm:$0xff]
        %v212 = vld [vmem:[%s117 + $0x250] sm:$0xff]
        %v213 = vld [vmem:[%s117 + $0x258] sm:$0xff]
        %v214 = vld [vmem:[%s117 + $0x260] sm:$0xff]
        %v215 = vld [vmem:[%s117 + $0x268] sm:$0xff]
        %v216 = vld [vmem:[%s117 + $0x270] sm:$0xff]
        %v217 = vld [vmem:[%s117 + $0x278] sm:$0xff]
        %v218 = vld [vmem:[%s117 + $0x280] sm:$0xff]
        %v219 = vld [vmem:[%s117 + $0x288] sm:$0xff]
        %v220 = vld [vmem:[%s117 + $0x290] sm:$0xff]
        %v221 = vld [vmem:[%s117 + $0x298] sm:$0xff]
        %v222 = vld [vmem:[%s117 + $0x2a0] sm:$0xff]
        %v223 = vld [vmem:[%s117 + $0x2a8] sm:$0xff]
        %v224 = vld [vmem:[%s117 + $0x2b0] sm:$0xff]
        %v225 = vld [vmem:[%s117 + $0x2b8] sm:$0xff]
        %v226 = vld [vmem:[%s117 + $0x2c0] sm:$0xff]
        %v227 = vld [vmem:[%s117 + $0x2c8] sm:$0xff]
        %v228 = vld [vmem:[%s117 + $0x2d0] sm:$0xff]
        %v229 = vld [vmem:[%s117 + $0x2d8] sm:$0xff]
        %v230 = vld [vmem:[%s117 + $0x2e0] sm:$0xff]
        %v231 = vld [vmem:[%s117 + $0x2e8] sm:$0xff]
        %v232 = vld [vmem:[%s117 + $0x2f0] sm:$0xff]
        %v233 = vld [vmem:[%s117 + $0x2f8] sm:$0xff]
        %v234 = vld [vmem:[%s117 + $0x300] sm:$0xff]
        %v235 = vld [vmem:[%s117 + $0x308] sm:$0xff]
        %v236 = vld [vmem:[%s117 + $0x310] sm:$0xff]
        %v237 = vld [vmem:[%s117 + $0x318] sm:$0xff]
        %v238 = vld [vmem:[%s117 + $0x320] sm:$0xff]
        %v239 = vld [vmem:[%s117 + $0x328] sm:$0xff]
        %v240 = vld [vmem:[%s117 + $0x330] sm:$0xff]
        %v241 = vld [vmem:[%s117 + $0x338] sm:$0xff]
        %v242 = vld [vmem:[%s117 + $0x340] sm:$0xff]
        %v243 = vld [vmem:[%s117 + $0x348] sm:$0xff]
        %v244 = vld [vmem:[%s117 + $0x350] sm:$0xff]
        %v245 = vld [vmem:[%s117 + $0x358] sm:$0xff]
        %v246 = vld [vmem:[%s117 + $0x360] sm:$0xff]
        %v247 = vld [vmem:[%s117 + $0x368] sm:$0xff]
        %v248 = vld [vmem:[%s117 + $0x370] sm:$0xff]
        %v249 = vld [vmem:[%s117 + $0x378] sm:$0xff]
        %v250 = vld [vmem:[%s117 + $0x380] sm:$0xff]
        %v251 = vld [vmem:[%s117 + $0x388] sm:$0xff]
        %v252 = vld [vmem:[%s117 + $0x390] sm:$0xff]
        %v253 = vld [vmem:[%s117 + $0x398] sm:$0xff]
        %v254 = vld [vmem:[%s117 + $0x3a0] sm:$0xff]
        %v255 = vld [vmem:[%s117 + $0x3a8] sm:$0xff]
        %v256 = vld [vmem:[%s117 + $0x3b0] sm:$0xff]
        %v257 = vld [vmem:[%s117 + $0x3b8] sm:$0xff]
        %v258 = vld [vmem:[%s117 + $0x3c0] sm:$0xff]
        %v259 = vld [vmem:[%s117 + $0x3c8] sm:$0xff]
        %v260 = vld [vmem:[%s117 + $0x3d0] sm:$0xff]
        %v261 = vld [vmem:[%s117 + $0x3d8] sm:$0xff]
        %v262 = vld [vmem:[%s117 + $0x3e0] sm:$0xff]
        %v263 = vld [vmem:[%s117 + $0x3e8] sm:$0xff]
        %v264 = vld [vmem:[%s117 + $0x3f0] sm:$0xff]
        %v265 = vld [vmem:[%s117 + $0x3f8] sm:$0xff]
        %v266 = vmax.f32 %v138, %v139
        %267 = vmax.xlane.f32.xlu0 %v266
        %v268 = vpop.xlane.xlu0 %267
        %v269 = vmax.f32 %v140, %v141
        %270 = vmax.xlane.f32.xlu0 %v269
        %v271 = vpop.xlane.xlu0 %270
        %v272 = vmax.f32 %v142, %v143
        %273 = vmax.xlane.f32.xlu0 %v272
        %v274 = vpop.xlane.xlu0 %273
        %v275 = vmax.f32 %v144, %v145
        %276 = vmax.xlane.f32.xlu0 %v275
        %v277 = vpop.xlane.xlu0 %276
        %v278 = vmax.f32 %v146, %v147
        %279 = vmax.xlane.f32.xlu0 %v278
        %v280 = vpop.xlane.xlu0 %279
        %v281 = vmax.f32 %v148, %v149
        %282 = vmax.xlane.f32.xlu0 %v281
        %v283 = vpop.xlane.xlu0 %282
        %v284 = vmax.f32 %v150, %v151
        %285 = vmax.xlane.f32.xlu0 %v284
        %v286 = vpop.xlane.xlu0 %285
        %v287 = vmax.f32 %v152, %v153
        %288 = vmax.xlane.f32.xlu0 %v287
        %v289 = vpop.xlane.xlu0 %288
        %v290 = vmax.f32 %v154, %v155
        %291 = vmax.xlane.f32.xlu0 %v290
        %v292 = vpop.xlane.xlu0 %291
        %v293 = vmax.f32 %v156, %v157
        %294 = vmax.xlane.f32.xlu0 %v293
        %v295 = vpop.xlane.xlu0 %294
        %v296 = vmax.f32 %v158, %v159
        %297 = vmax.xlane.f32.xlu0 %v296
        %v298 = vpop.xlane.xlu0 %297
        %v299 = vmax.f32 %v160, %v161
        %300 = vmax.xlane.f32.xlu0 %v299
        %v301 = vpop.xlane.xlu0 %300
        %v302 = vmax.f32 %v162, %v163
        %303 = vmax.xlane.f32.xlu0 %v302
        %v304 = vpop.xlane.xlu0 %303
        %v305 = vmax.f32 %v164, %v165
        %306 = vmax.xlane.f32.xlu0 %v305
        %v307 = vpop.xlane.xlu0 %306
        %v308 = vmax.f32 %v166, %v167
        %309 = vmax.xlane.f32.xlu0 %v308
        %v310 = vpop.xlane.xlu0 %309
        %v311 = vmax.f32 %v168, %v169
        %312 = vmax.xlane.f32.xlu0 %v311
        %v313 = vpop.xlane.xlu0 %312
        %v314 = vmax.f32 %v170, %v171
        %315 = vmax.xlane.f32.xlu0 %v314
        %v316 = vpop.xlane.xlu0 %315
        %v317 = vmax.f32 %v172, %v173
        %318 = vmax.xlane.f32.xlu0 %v317
        %v319 = vpop.xlane.xlu0 %318
        %v320 = vmax.f32 %v174, %v175
        %321 = vmax.xlane.f32.xlu0 %v320
        %v322 = vpop.xlane.xlu0 %321
        %v323 = vmax.f32 %v176, %v177
        %324 = vmax.xlane.f32.xlu0 %v323
        %v325 = vpop.xlane.xlu0 %324
        %v326 = vmax.f32 %v178, %v179
        %327 = vmax.xlane.f32.xlu0 %v326
        %v328 = vpop.xlane.xlu0 %327
        %v329 = vmax.f32 %v180, %v181
        %330 = vmax.xlane.f32.xlu0 %v329
        %v331 = vpop.xlane.xlu0 %330
        %v332 = vmax.f32 %v182, %v183
        %333 = vmax.xlane.f32.xlu0 %v332
        %v334 = vpop.xlane.xlu0 %333
        %v335 = vmax.f32 %v184, %v185
        %336 = vmax.xlane.f32.xlu0 %v335
        %v337 = vpop.xlane.xlu0 %336
        %v338 = vmax.f32 %v186, %v187
        %339 = vmax.xlane.f32.xlu0 %v338
        %v340 = vpop.xlane.xlu0 %339
        %v341 = vmax.f32 %v188, %v189
        %342 = vmax.xlane.f32.xlu0 %v341
        %v343 = vpop.xlane.xlu0 %342
        %v344 = vmax.f32 %v190, %v191
        %345 = vmax.xlane.f32.xlu0 %v344
        %v346 = vpop.xlane.xlu0 %345
        %v347 = vmax.f32 %v192, %v193
        %348 = vmax.xlane.f32.xlu0 %v347
        %v349 = vpop.xlane.xlu0 %348
        %v350 = vmax.f32 %v194, %v195
        %351 = vmax.xlane.f32.xlu0 %v350
        %v352 = vpop.xlane.xlu0 %351
        %v353 = vmax.f32 %v196, %v197
        %354 = vmax.xlane.f32.xlu0 %v353
        %v355 = vpop.xlane.xlu0 %354
        %v356 = vmax.f32 %v198, %v199
        %357 = vmax.xlane.f32.xlu0 %v356
        %v358 = vpop.xlane.xlu0 %357
        %v359 = vmax.f32 %v200, %v201
        %360 = vmax.xlane.f32.xlu0 %v359
        %v361 = vpop.xlane.xlu0 %360
        %v362 = vmax.f32 %v202, %v203
        %363 = vmax.xlane.f32.xlu0 %v362
        %v364 = vpop.xlane.xlu0 %363
        %v365 = vmax.f32 %v204, %v205
        %366 = vmax.xlane.f32.xlu0 %v365
        %v367 = vpop.xlane.xlu0 %366
        %v368 = vmax.f32 %v206, %v207
        %369 = vmax.xlane.f32.xlu0 %v368
        %v370 = vpop.xlane.xlu0 %369
        %v371 = vmax.f32 %v208, %v209
        %372 = vmax.xlane.f32.xlu0 %v371
        %v373 = vpop.xlane.xlu0 %372
        %v374 = vmax.f32 %v210, %v211
        %375 = vmax.xlane.f32.xlu0 %v374
        %v376 = vpop.xlane.xlu0 %375
        %v377 = vmax.f32 %v212, %v213
        %378 = vmax.xlane.f32.xlu0 %v377
        %v379 = vpop.xlane.xlu0 %378
        %v380 = vmax.f32 %v214, %v215
        %381 = vmax.xlane.f32.xlu0 %v380
        %v382 = vpop.xlane.xlu0 %381
        %v383 = vmax.f32 %v216, %v217
        %384 = vmax.xlane.f32.xlu0 %v383
        %v385 = vpop.xlane.xlu0 %384
        %v386 = vmax.f32 %v218, %v219
        %387 = vmax.xlane.f32.xlu0 %v386
        %v388 = vpop.xlane.xlu0 %387
        %v389 = vmax.f32 %v220, %v221
        %390 = vmax.xlane.f32.xlu0 %v389
        %v391 = vpop.xlane.xlu0 %390
        %v392 = vmax.f32 %v222, %v223
        %393 = vmax.xlane.f32.xlu0 %v392
        %v394 = vpop.xlane.xlu0 %393
        %v395 = vmax.f32 %v224, %v225
        %396 = vmax.xlane.f32.xlu0 %v395
        %v397 = vpop.xlane.xlu0 %396
        %v398 = vmax.f32 %v226, %v227
        %399 = vmax.xlane.f32.xlu0 %v398
        %v400 = vpop.xlane.xlu0 %399
        %v401 = vmax.f32 %v228, %v229
        %402 = vmax.xlane.f32.xlu0 %v401
        %v403 = vpop.xlane.xlu0 %402
        %v404 = vmax.f32 %v230, %v231
        %405 = vmax.xlane.f32.xlu0 %v404
        %v406 = vpop.xlane.xlu0 %405
        %v407 = vmax.f32 %v232, %v233
        %408 = vmax.xlane.f32.xlu0 %v407
        %v409 = vpop.xlane.xlu0 %408
        %v410 = vmax.f32 %v234, %v235
        %411 = vmax.xlane.f32.xlu0 %v410
        %v412 = vpop.xlane.xlu0 %411
        %v413 = vmax.f32 %v236, %v237
        %414 = vmax.xlane.f32.xlu0 %v413
        %v415 = vpop.xlane.xlu0 %414
        %v416 = vmax.f32 %v238, %v239
        %417 = vmax.xlane.f32.xlu0 %v416
        %v418 = vpop.xlane.xlu0 %417
        %v419 = vmax.f32 %v240, %v241
        %420 = vmax.xlane.f32.xlu0 %v419
        %v421 = vpop.xlane.xlu0 %420
        %v422 = vmax.f32 %v242, %v243
        %423 = vmax.xlane.f32.xlu0 %v422
        %v424 = vpop.xlane.xlu0 %423
        %v425 = vmax.f32 %v244, %v245
        %426 = vmax.xlane.f32.xlu0 %v425
        %v427 = vpop.xlane.xlu0 %426
        %v428 = vmax.f32 %v246, %v247
        %429 = vmax.xlane.f32.xlu0 %v428
        %v430 = vpop.xlane.xlu0 %429
        %v431 = vmax.f32 %v248, %v249
        %432 = vmax.xlane.f32.xlu0 %v431
        %v433 = vpop.xlane.xlu0 %432
        %v434 = vmax.f32 %v250, %v251
        %435 = vmax.xlane.f32.xlu0 %v434
        %v436 = vpop.xlane.xlu0 %435
        %v437 = vmax.f32 %v252, %v253
        %438 = vmax.xlane.f32.xlu0 %v437
        %v439 = vpop.xlane.xlu0 %438
        %v440 = vmax.f32 %v254, %v255
        %441 = vmax.xlane.f32.xlu0 %v440
        %v442 = vpop.xlane.xlu0 %441
        %v443 = vmax.f32 %v256, %v257
        %444 = vmax.xlane.f32.xlu0 %v443
        %v445 = vpop.xlane.xlu0 %444
        %v446 = vmax.f32 %v258, %v259
        %447 = vmax.xlane.f32.xlu0 %v446
        %v448 = vpop.xlane.xlu0 %447
        %v449 = vmax.f32 %v260, %v261
        %450 = vmax.xlane.f32.xlu0 %v449
        %v451 = vpop.xlane.xlu0 %450
        %v452 = vmax.f32 %v262, %v263
        %453 = vmax.xlane.f32.xlu0 %v452
        %v454 = vpop.xlane.xlu0 %453
        %v455 = vmax.f32 %v264, %v265
        %456 = vmax.xlane.f32.xlu0 %v455
        %v457 = vpop.xlane.xlu0 %456
        %v458 = vsub.f32 %v138, %v268
        %v459 = vsub.f32 %v139, %v268
        %v460 = vsub.f32 %v140, %v271
        %v461 = vsub.f32 %v141, %v271
        %v462 = vsub.f32 %v142, %v274
        %v463 = vsub.f32 %v143, %v274
        %v464 = vsub.f32 %v144, %v277
        %v465 = vsub.f32 %v145, %v277
        %v466 = vsub.f32 %v146, %v280
        %v467 = vsub.f32 %v147, %v280
        %v468 = vsub.f32 %v148, %v283
        %v469 = vsub.f32 %v149, %v283
        %v470 = vsub.f32 %v150, %v286
        %v471 = vsub.f32 %v151, %v286
        %v472 = vsub.f32 %v152, %v289
        %v473 = vsub.f32 %v153, %v289
        %v474 = vsub.f32 %v154, %v292
        %v475 = vsub.f32 %v155, %v292
        %v476 = vsub.f32 %v156, %v295
        %v477 = vsub.f32 %v157, %v295
        %v478 = vsub.f32 %v158, %v298
        %v479 = vsub.f32 %v159, %v298
        %v480 = vsub.f32 %v160, %v301
        %v481 = vsub.f32 %v161, %v301
        %v482 = vsub.f32 %v162, %v304
        %v483 = vsub.f32 %v163, %v304
        %v484 = vsub.f32 %v164, %v307
        %v485 = vsub.f32 %v165, %v307
        %v486 = vsub.f32 %v166, %v310
        %v487 = vsub.f32 %v167, %v310
        %v488 = vsub.f32 %v168, %v313
        %v489 = vsub.f32 %v169, %v313
        %v490 = vsub.f32 %v170, %v316
        %v491 = vsub.f32 %v171, %v316
        %v492 = vsub.f32 %v172, %v319
        %v493 = vsub.f32 %v173, %v319
        %v494 = vsub.f32 %v174, %v322
        %v495 = vsub.f32 %v175, %v322
        %v496 = vsub.f32 %v176, %v325
        %v497 = vsub.f32 %v177, %v325
        %v498 = vsub.f32 %v178, %v328
        %v499 = vsub.f32 %v179, %v328
        %v500 = vsub.f32 %v180, %v331
        %v501 = vsub.f32 %v181, %v331
        %v502 = vsub.f32 %v182, %v334
        %v503 = vsub.f32 %v183, %v334
        %v504 = vsub.f32 %v184, %v337
        %v505 = vsub.f32 %v185, %v337
        %v506 = vsub.f32 %v186, %v340
        %v507 = vsub.f32 %v187, %v340
        %v508 = vsub.f32 %v188, %v343
        %v509 = vsub.f32 %v189, %v343
        %v510 = vsub.f32 %v190, %v346
        %v511 = vsub.f32 %v191, %v346
        %v512 = vsub.f32 %v192, %v349
        %v513 = vsub.f32 %v193, %v349
        %v514 = vsub.f32 %v194, %v352
        %v515 = vsub.f32 %v195, %v352
        %v516 = vsub.f32 %v196, %v355
        %v517 = vsub.f32 %v197, %v355
        %v518 = vsub.f32 %v198, %v358
        %v519 = vsub.f32 %v199, %v358
        %v520 = vsub.f32 %v200, %v361
        %v521 = vsub.f32 %v201, %v361
        %v522 = vsub.f32 %v202, %v364
        %v523 = vsub.f32 %v203, %v364
        %v524 = vsub.f32 %v204, %v367
        %v525 = vsub.f32 %v205, %v367
        %v526 = vsub.f32 %v206, %v370
        %v527 = vsub.f32 %v207, %v370
        %v528 = vsub.f32 %v208, %v373
        %v529 = vsub.f32 %v209, %v373
        %v530 = vsub.f32 %v210, %v376
        %v531 = vsub.f32 %v211, %v376
        %v532 = vsub.f32 %v212, %v379
        %v533 = vsub.f32 %v213, %v379
        %v534 = vsub.f32 %v214, %v382
        %v535 = vsub.f32 %v215, %v382
        %v536 = vsub.f32 %v216, %v385
        %v537 = vsub.f32 %v217, %v385
        %v538 = vsub.f32 %v218, %v388
        %v539 = vsub.f32 %v219, %v388
        %v540 = vsub.f32 %v220, %v391
        %v541 = vsub.f32 %v221, %v391
        %v542 = vsub.f32 %v222, %v394
        %v543 = vsub.f32 %v223, %v394
        %v544 = vsub.f32 %v224, %v397
        %v545 = vsub.f32 %v225, %v397
        %v546 = vsub.f32 %v226, %v400
        %v547 = vsub.f32 %v227, %v400
        %v548 = vsub.f32 %v228, %v403
        %v549 = vsub.f32 %v229, %v403
        %v550 = vsub.f32 %v230, %v406
        %v551 = vsub.f32 %v231, %v406
        %v552 = vsub.f32 %v232, %v409
        %v553 = vsub.f32 %v233, %v409
        %v554 = vsub.f32 %v234, %v412
        %v555 = vsub.f32 %v235, %v412
        %v556 = vsub.f32 %v236, %v415
        %v557 = vsub.f32 %v237, %v415
        %v558 = vsub.f32 %v238, %v418
        %v559 = vsub.f32 %v239, %v418
        %v560 = vsub.f32 %v240, %v421
        %v561 = vsub.f32 %v241, %v421
        %v562 = vsub.f32 %v242, %v424
        %v563 = vsub.f32 %v243, %v424
        %v564 = vsub.f32 %v244, %v427
        %v565 = vsub.f32 %v245, %v427
        %v566 = vsub.f32 %v246, %v430
        %v567 = vsub.f32 %v247, %v430
        %v568 = vsub.f32 %v248, %v433
        %v569 = vsub.f32 %v249, %v433
        %v570 = vsub.f32 %v250, %v436
        %v571 = vsub.f32 %v251, %v436
        %v572 = vsub.f32 %v252, %v439
        %v573 = vsub.f32 %v253, %v439
        %v574 = vsub.f32 %v254, %v442
        %v575 = vsub.f32 %v255, %v442
        %v576 = vsub.f32 %v256, %v445
        %v577 = vsub.f32 %v257, %v445
        %v578 = vsub.f32 %v258, %v448
        %v579 = vsub.f32 %v259, %v448
        %v580 = vsub.f32 %v260, %v451
        %v581 = vsub.f32 %v261, %v451
        %v582 = vsub.f32 %v262, %v454
        %v583 = vsub.f32 %v263, %v454
        %v584 = vsub.f32 %v264, %v457
        %v585 = vsub.f32 %v265, %v457
        %v586 = vmul.f32 %v458, 1.442695
        %v587 = vpow.pop %v586
        %v588 = vmul.f32 %v459, 1.442695
        %v589 = vpow.pop %v588
        %v590 = vmul.f32 %v460, 1.442695
        %v591 = vpow.pop %v590
        %v592 = vmul.f32 %v461, 1.442695
        %v593 = vpow.pop %v592
        %v594 = vmul.f32 %v462, 1.442695
        %v595 = vpow.pop %v594
        %v596 = vmul.f32 %v463, 1.442695
        %v597 = vpow.pop %v596
        %v598 = vmul.f32 %v464, 1.442695
        %v599 = vpow.pop %v598
        %v600 = vmul.f32 %v465, 1.442695
        %v601 = vpow.pop %v600
        %v602 = vmul.f32 %v466, 1.442695
        %v603 = vpow.pop %v602
        %v604 = vmul.f32 %v467, 1.442695
        %v605 = vpow.pop %v604
        %v606 = vmul.f32 %v468, 1.442695
        %v607 = vpow.pop %v606
        %v608 = vmul.f32 %v469, 1.442695
        %v609 = vpow.pop %v608
        %v610 = vmul.f32 %v470, 1.442695
        %v611 = vpow.pop %v610
        %v612 = vmul.f32 %v471, 1.442695
        %v613 = vpow.pop %v612
        %v614 = vmul.f32 %v472, 1.442695
        %v615 = vpow.pop %v614
        %v616 = vmul.f32 %v473, 1.442695
        %v617 = vpow.pop %v616
        %v618 = vmul.f32 %v474, 1.442695
        %v619 = vpow.pop %v618
        %v620 = vmul.f32 %v475, 1.442695
        %v621 = vpow.pop %v620
        %v622 = vmul.f32 %v476, 1.442695
        %v623 = vpow.pop %v622
        %v624 = vmul.f32 %v477, 1.442695
        %v625 = vpow.pop %v624
        %v626 = vmul.f32 %v478, 1.442695
        %v627 = vpow.pop %v626
        %v628 = vmul.f32 %v479, 1.442695
        %v629 = vpow.pop %v628
        %v630 = vmul.f32 %v480, 1.442695
        %v631 = vpow.pop %v630
        %v632 = vmul.f32 %v481, 1.442695
        %v633 = vpow.pop %v632
        %v634 = vmul.f32 %v482, 1.442695
        %v635 = vpow.pop %v634
        %v636 = vmul.f32 %v483, 1.442695
        %v637 = vpow.pop %v636
        %v638 = vmul.f32 %v484, 1.442695
        %v639 = vpow.pop %v638
        %v640 = vmul.f32 %v485, 1.442695
        %v641 = vpow.pop %v640
        %v642 = vmul.f32 %v486, 1.442695
        %v643 = vpow.pop %v642
        %v644 = vmul.f32 %v487, 1.442695
        %v645 = vpow.pop %v644
        %v646 = vmul.f32 %v488, 1.442695
        %v647 = vpow.pop %v646
        %v648 = vmul.f32 %v489, 1.442695
        %v649 = vpow.pop %v648
        %v650 = vmul.f32 %v490, 1.442695
        %v651 = vpow.pop %v650
        %v652 = vmul.f32 %v491, 1.442695
        %v653 = vpow.pop %v652
        %v654 = vmul.f32 %v492, 1.442695
        %v655 = vpow.pop %v654
        %v656 = vmul.f32 %v493, 1.442695
        %v657 = vpow.pop %v656
        %v658 = vmul.f32 %v494, 1.442695
        %v659 = vpow.pop %v658
        %v660 = vmul.f32 %v495, 1.442695
        %v661 = vpow.pop %v660
        %v662 = vmul.f32 %v496, 1.442695
        %v663 = vpow.pop %v662
        %v664 = vmul.f32 %v497, 1.442695
        %v665 = vpow.pop %v664
        %v666 = vmul.f32 %v498, 1.442695
        %v667 = vpow.pop %v666
        %v668 = vmul.f32 %v499, 1.442695
        %v669 = vpow.pop %v668
        %v670 = vmul.f32 %v500, 1.442695
        %v671 = vpow.pop %v670
        %v672 = vmul.f32 %v501, 1.442695
        %v673 = vpow.pop %v672
        %v674 = vmul.f32 %v502, 1.442695
        %v675 = vpow.pop %v674
        %v676 = vmul.f32 %v503, 1.442695
        %v677 = vpow.pop %v676
        %v678 = vmul.f32 %v504, 1.442695
        %v679 = vpow.pop %v678
        %v680 = vmul.f32 %v505, 1.442695
        %v681 = vpow.pop %v680
        %v682 = vmul.f32 %v506, 1.442695
        %v683 = vpow.pop %v682
        %v684 = vmul.f32 %v507, 1.442695
        %v685 = vpow.pop %v684
        %v686 = vmul.f32 %v508, 1.442695
        %v687 = vpow.pop %v686
        %v688 = vmul.f32 %v509, 1.442695
        %v689 = vpow.pop %v688
        %v690 = vmul.f32 %v510, 1.442695
        %v691 = vpow.pop %v690
        %v692 = vmul.f32 %v511, 1.442695
        %v693 = vpow.pop %v692
        %v694 = vmul.f32 %v512, 1.442695
        %v695 = vpow.pop %v694
        %v696 = vmul.f32 %v513, 1.442695
        %v697 = vpow.pop %v696
        %v698 = vmul.f32 %v514, 1.442695
        %v699 = vpow.pop %v698
        %v700 = vmul.f32 %v515, 1.442695
        %v701 = vpow.pop %v700
        %v702 = vmul.f32 %v516, 1.442695
        %v703 = vpow.pop %v702
        %v704 = vmul.f32 %v517, 1.442695
        %v705 = vpow.pop %v704
        %v706 = vmul.f32 %v518, 1.442695
        %v707 = vpow.pop %v706
        %v708 = vmul.f32 %v519, 1.442695
        %v709 = vpow.pop %v708
        %v710 = vmul.f32 %v520, 1.442695
        %v711 = vpow.pop %v710
        %v712 = vmul.f32 %v521, 1.442695
        %v713 = vpow.pop %v712
        %v714 = vmul.f32 %v522, 1.442695
        %v715 = vpow.pop %v714
        %v716 = vmul.f32 %v523, 1.442695
        %v717 = vpow.pop %v716
        %v718 = vmul.f32 %v524, 1.442695
        %v719 = vpow.pop %v718
        %v720 = vmul.f32 %v525, 1.442695
        %v721 = vpow.pop %v720
        %v722 = vmul.f32 %v526, 1.442695
        %v723 = vpow.pop %v722
        %v724 = vmul.f32 %v527, 1.442695
        %v725 = vpow.pop %v724
        %v726 = vmul.f32 %v528, 1.442695
        %v727 = vpow.pop %v726
        %v728 = vmul.f32 %v529, 1.442695
        %v729 = vpow.pop %v728
        %v730 = vmul.f32 %v530, 1.442695
        %v731 = vpow.pop %v730
        %v732 = vmul.f32 %v531, 1.442695
        %v733 = vpow.pop %v732
        %v734 = vmul.f32 %v532, 1.442695
        %v735 = vpow.pop %v734
        %v736 = vmul.f32 %v533, 1.442695
        %v737 = vpow.pop %v736
        %v738 = vmul.f32 %v534, 1.442695
        %v739 = vpow.pop %v738
        %v740 = vmul.f32 %v535, 1.442695
        %v741 = vpow.pop %v740
        %v742 = vmul.f32 %v536, 1.442695
        %v743 = vpow.pop %v742
        %v744 = vmul.f32 %v537, 1.442695
        %v745 = vpow.pop %v744
        %v746 = vmul.f32 %v538, 1.442695
        %v747 = vpow.pop %v746
        %v748 = vmul.f32 %v539, 1.442695
        %v749 = vpow.pop %v748
        %v750 = vmul.f32 %v540, 1.442695
        %v751 = vpow.pop %v750
        %v752 = vmul.f32 %v541, 1.442695
        %v753 = vpow.pop %v752
        %v754 = vmul.f32 %v542, 1.442695
        %v755 = vpow.pop %v754
        %v756 = vmul.f32 %v543, 1.442695
        %v757 = vpow.pop %v756
        %v758 = vmul.f32 %v544, 1.442695
        %v759 = vpow.pop %v758
        %v760 = vmul.f32 %v545, 1.442695
        %v761 = vpow.pop %v760
        %v762 = vmul.f32 %v546, 1.442695
        %v763 = vpow.pop %v762
        %v764 = vmul.f32 %v547, 1.442695
        %v765 = vpow.pop %v764
        %v766 = vmul.f32 %v548, 1.442695
        %v767 = vpow.pop %v766
        %v768 = vmul.f32 %v549, 1.442695
        %v769 = vpow.pop %v768
        %v770 = vmul.f32 %v550, 1.442695
        %v771 = vpow.pop %v770
        %v772 = vmul.f32 %v551, 1.442695
        %v773 = vpow.pop %v772
        %v774 = vmul.f32 %v552, 1.442695
        %v775 = vpow.pop %v774
        %v776 = vmul.f32 %v553, 1.442695
        %v777 = vpow.pop %v776
        %v778 = vmul.f32 %v554, 1.442695
        %v779 = vpow.pop %v778
        %v780 = vmul.f32 %v555, 1.442695
        %v781 = vpow.pop %v780
        %v782 = vmul.f32 %v556, 1.442695
        %v783 = vpow.pop %v782
        %v784 = vmul.f32 %v557, 1.442695
        %v785 = vpow.pop %v784
        %v786 = vmul.f32 %v558, 1.442695
        %v787 = vpow.pop %v786
        %v788 = vmul.f32 %v559, 1.442695
        %v789 = vpow.pop %v788
        %v790 = vmul.f32 %v560, 1.442695
        %v791 = vpow.pop %v790
        %v792 = vmul.f32 %v561, 1.442695
        %v793 = vpow.pop %v792
        %v794 = vmul.f32 %v562, 1.442695
        %v795 = vpow.pop %v794
        %v796 = vmul.f32 %v563, 1.442695
        %v797 = vpow.pop %v796
        %v798 = vmul.f32 %v564, 1.442695
        %v799 = vpow.pop %v798
        %v800 = vmul.f32 %v565, 1.442695
        %v801 = vpow.pop %v800
        %v802 = vmul.f32 %v566, 1.442695
        %v803 = vpow.pop %v802
        %v804 = vmul.f32 %v567, 1.442695
        %v805 = vpow.pop %v804
        %v806 = vmul.f32 %v568, 1.442695
        %v807 = vpow.pop %v806
        %v808 = vmul.f32 %v569, 1.442695
        %v809 = vpow.pop %v808
        %v810 = vmul.f32 %v570, 1.442695
        %v811 = vpow.pop %v810
        %v812 = vmul.f32 %v571, 1.442695
        %v813 = vpow.pop %v812
        %v814 = vmul.f32 %v572, 1.442695
        %v815 = vpow.pop %v814
        %v816 = vmul.f32 %v573, 1.442695
        %v817 = vpow.pop %v816
        %v818 = vmul.f32 %v574, 1.442695
        %v819 = vpow.pop %v818
        %v820 = vmul.f32 %v575, 1.442695
        %v821 = vpow.pop %v820
        %v822 = vmul.f32 %v576, 1.442695
        %v823 = vpow.pop %v822
        %v824 = vmul.f32 %v577, 1.442695
        %v825 = vpow.pop %v824
        %v826 = vmul.f32 %v578, 1.442695
        %v827 = vpow.pop %v826
        %v828 = vmul.f32 %v579, 1.442695
        %v829 = vpow.pop %v828
        %v830 = vmul.f32 %v580, 1.442695
        %v831 = vpow.pop %v830
        %v832 = vmul.f32 %v581, 1.442695
        %v833 = vpow.pop %v832
        %v834 = vmul.f32 %v582, 1.442695
        %v835 = vpow.pop %v834
        %v836 = vmul.f32 %v583, 1.442695
        %v837 = vpow.pop %v836
        %v838 = vmul.f32 %v584, 1.442695
        %v839 = vpow.pop %v838
        %v840 = vmul.f32 %v585, 1.442695
        %v841 = vpow.pop %v840
        %v842 = vadd.f32 %v587, %v589
        %843 = vadd.xlane.f32.xlu0 %v842
        %v844 = vpop.xlane.xlu0 %843
        %v845 = vadd.f32 %v591, %v593
        %846 = vadd.xlane.f32.xlu0 %v845
        %v847 = vpop.xlane.xlu0 %846
        %v848 = vadd.f32 %v595, %v597
        %849 = vadd.xlane.f32.xlu0 %v848
        %v850 = vpop.xlane.xlu0 %849
        %v851 = vadd.f32 %v599, %v601
        %852 = vadd.xlane.f32.xlu0 %v851
        %v853 = vpop.xlane.xlu0 %852
        %v854 = vadd.f32 %v603, %v605
        %855 = vadd.xlane.f32.xlu0 %v854
        %v856 = vpop.xlane.xlu0 %855
        %v857 = vadd.f32 %v607, %v609
        %858 = vadd.xlane.f32.xlu0 %v857
        %v859 = vpop.xlane.xlu0 %858
        %v860 = vadd.f32 %v611, %v613
        %861 = vadd.xlane.f32.xlu0 %v860
        %v862 = vpop.xlane.xlu0 %861
        %v863 = vadd.f32 %v615, %v617
        %864 = vadd.xlane.f32.xlu0 %v863
        %v865 = vpop.xlane.xlu0 %864
        %v866 = vadd.f32 %v619, %v621
        %867 = vadd.xlane.f32.xlu0 %v866
        %v868 = vpop.xlane.xlu0 %867
        %v869 = vadd.f32 %v623, %v625
        %870 = vadd.xlane.f32.xlu0 %v869
        %v871 = vpop.xlane.xlu0 %870
        %v872 = vadd.f32 %v627, %v629
        %873 = vadd.xlane.f32.xlu0 %v872
        %v874 = vpop.xlane.xlu0 %873
        %v875 = vadd.f32 %v631, %v633
        %876 = vadd.xlane.f32.xlu0 %v875
        %v877 = vpop.xlane.xlu0 %876
        %v878 = vadd.f32 %v635, %v637
        %879 = vadd.xlane.f32.xlu0 %v878
        %v880 = vpop.xlane.xlu0 %879
        %v881 = vadd.f32 %v639, %v641
        %882 = vadd.xlane.f32.xlu0 %v881
        %v883 = vpop.xlane.xlu0 %882
        %v884 = vadd.f32 %v643, %v645
        %885 = vadd.xlane.f32.xlu0 %v884
        %v886 = vpop.xlane.xlu0 %885
        %v887 = vadd.f32 %v647, %v649
        %888 = vadd.xlane.f32.xlu0 %v887
        %v889 = vpop.xlane.xlu0 %888
        %v890 = vadd.f32 %v651, %v653
        %891 = vadd.xlane.f32.xlu0 %v890
        %v892 = vpop.xlane.xlu0 %891
        %v893 = vadd.f32 %v655, %v657
        %894 = vadd.xlane.f32.xlu0 %v893
        %v895 = vpop.xlane.xlu0 %894
        %v896 = vadd.f32 %v659, %v661
        %897 = vadd.xlane.f32.xlu0 %v896
        %v898 = vpop.xlane.xlu0 %897
        %v899 = vadd.f32 %v663, %v665
        %900 = vadd.xlane.f32.xlu0 %v899
        %v901 = vpop.xlane.xlu0 %900
        %v902 = vadd.f32 %v667, %v669
        %903 = vadd.xlane.f32.xlu0 %v902
        %v904 = vpop.xlane.xlu0 %903
        %v905 = vadd.f32 %v671, %v673
        %906 = vadd.xlane.f32.xlu0 %v905
        %v907 = vpop.xlane.xlu0 %906
        %v908 = vadd.f32 %v675, %v677
        %909 = vadd.xlane.f32.xlu0 %v908
        %v910 = vpop.xlane.xlu0 %909
        %v911 = vadd.f32 %v679, %v681
        %912 = vadd.xlane.f32.xlu0 %v911
        %v913 = vpop.xlane.xlu0 %912
        %v914 = vadd.f32 %v683, %v685
        %915 = vadd.xlane.f32.xlu0 %v914
        %v916 = vpop.xlane.xlu0 %915
        %v917 = vadd.f32 %v687, %v689
        %918 = vadd.xlane.f32.xlu0 %v917
        %v919 = vpop.xlane.xlu0 %918
        %v920 = vadd.f32 %v691, %v693
        %921 = vadd.xlane.f32.xlu0 %v920
        %v922 = vpop.xlane.xlu0 %921
        %v923 = vadd.f32 %v695, %v697
        %924 = vadd.xlane.f32.xlu0 %v923
        %v925 = vpop.xlane.xlu0 %924
        %v926 = vadd.f32 %v699, %v701
        %927 = vadd.xlane.f32.xlu0 %v926
        %v928 = vpop.xlane.xlu0 %927
        %v929 = vadd.f32 %v703, %v705
        %930 = vadd.xlane.f32.xlu0 %v929
        %v931 = vpop.xlane.xlu0 %930
        %v932 = vadd.f32 %v707, %v709
        %933 = vadd.xlane.f32.xlu0 %v932
        %v934 = vpop.xlane.xlu0 %933
        %v935 = vadd.f32 %v711, %v713
        %936 = vadd.xlane.f32.xlu0 %v935
        %v937 = vpop.xlane.xlu0 %936
        %v938 = vadd.f32 %v715, %v717
        %939 = vadd.xlane.f32.xlu0 %v938
        %v940 = vpop.xlane.xlu0 %939
        %v941 = vadd.f32 %v719, %v721
        %942 = vadd.xlane.f32.xlu0 %v941
        %v943 = vpop.xlane.xlu0 %942
        %v944 = vadd.f32 %v723, %v725
        %945 = vadd.xlane.f32.xlu0 %v944
        %v946 = vpop.xlane.xlu0 %945
        %v947 = vadd.f32 %v727, %v729
        %948 = vadd.xlane.f32.xlu0 %v947
        %v949 = vpop.xlane.xlu0 %948
        %v950 = vadd.f32 %v731, %v733
        %951 = vadd.xlane.f32.xlu0 %v950
        %v952 = vpop.xlane.xlu0 %951
        %v953 = vadd.f32 %v735, %v737
        %954 = vadd.xlane.f32.xlu0 %v953
        %v955 = vpop.xlane.xlu0 %954
        %v956 = vadd.f32 %v739, %v741
        %957 = vadd.xlane.f32.xlu0 %v956
        %v958 = vpop.xlane.xlu0 %957
        %v959 = vadd.f32 %v743, %v745
        %960 = vadd.xlane.f32.xlu0 %v959
        %v961 = vpop.xlane.xlu0 %960
        %v962 = vadd.f32 %v747, %v749
        %963 = vadd.xlane.f32.xlu0 %v962
        %v964 = vpop.xlane.xlu0 %963
        %v965 = vadd.f32 %v751, %v753
        %966 = vadd.xlane.f32.xlu0 %v965
        %v967 = vpop.xlane.xlu0 %966
        %v968 = vadd.f32 %v755, %v757
        %969 = vadd.xlane.f32.xlu0 %v968
        %v970 = vpop.xlane.xlu0 %969
        %v971 = vadd.f32 %v759, %v761
        %972 = vadd.xlane.f32.xlu0 %v971
        %v973 = vpop.xlane.xlu0 %972
        %v974 = vadd.f32 %v763, %v765
        %975 = vadd.xlane.f32.xlu0 %v974
        %v976 = vpop.xlane.xlu0 %975
        %v977 = vadd.f32 %v767, %v769
        %978 = vadd.xlane.f32.xlu0 %v977
        %v979 = vpop.xlane.xlu0 %978
        %v980 = vadd.f32 %v771, %v773
        %981 = vadd.xlane.f32.xlu0 %v980
        %v982 = vpop.xlane.xlu0 %981
        %v983 = vadd.f32 %v775, %v777
        %984 = vadd.xlane.f32.xlu0 %v983
        %v985 = vpop.xlane.xlu0 %984
        %v986 = vadd.f32 %v779, %v781
        %987 = vadd.xlane.f32.xlu0 %v986
        %v988 = vpop.xlane.xlu0 %987
        %v989 = vadd.f32 %v783, %v785
        %990 = vadd.xlane.f32.xlu0 %v989
        %v991 = vpop.xlane.xlu0 %990
        %v992 = vadd.f32 %v787, %v789
        %993 = vadd.xlane.f32.xlu0 %v992
        %v994 = vpop.xlane.xlu0 %993
        %v995 = vadd.f32 %v791, %v793
        %996 = vadd.xlane.f32.xlu0 %v995
        %v997 = vpop.xlane.xlu0 %996
        %v998 = vadd.f32 %v795, %v797
        %999 = vadd.xlane.f32.xlu0 %v998
        %v1000 = vpop.xlane.xlu0 %999
        %v1001 = vadd.f32 %v799, %v801
        %1002 = vadd.xlane.f32.xlu0 %v1001
        %v1003 = vpop.xlane.xlu0 %1002
        %v1004 = vadd.f32 %v803, %v805
        %1005 = vadd.xlane.f32.xlu0 %v1004
        %v1006 = vpop.xlane.xlu0 %1005
        %v1007 = vadd.f32 %v807, %v809
        %1008 = vadd.xlane.f32.xlu0 %v1007
        %v1009 = vpop.xlane.xlu0 %1008
        %v1010 = vadd.f32 %v811, %v813
        %1011 = vadd.xlane.f32.xlu0 %v1010
        %v1012 = vpop.xlane.xlu0 %1011
        %v1013 = vadd.f32 %v815, %v817
        %1014 = vadd.xlane.f32.xlu0 %v1013
        %v1015 = vpop.xlane.xlu0 %1014
        %v1016 = vadd.f32 %v819, %v821
        %1017 = vadd.xlane.f32.xlu0 %v1016
        %v1018 = vpop.xlane.xlu0 %1017
        %v1019 = vadd.f32 %v823, %v825
        %1020 = vadd.xlane.f32.xlu0 %v1019
        %v1021 = vpop.xlane.xlu0 %1020
        %v1022 = vadd.f32 %v827, %v829
        %1023 = vadd.xlane.f32.xlu0 %v1022
        %v1024 = vpop.xlane.xlu0 %1023
        %v1025 = vadd.f32 %v831, %v833
        %1026 = vadd.xlane.f32.xlu0 %v1025
        %v1027 = vpop.xlane.xlu0 %1026
        %v1028 = vadd.f32 %v835, %v837
        %1029 = vadd.xlane.f32.xlu0 %v1028
        %v1030 = vpop.xlane.xlu0 %1029
        %v1031 = vadd.f32 %v839, %v841
        %1032 = vadd.xlane.f32.xlu0 %v1031
        %v1033 = vpop.xlane.xlu0 %1032
        %v1034 = vrcp.pop %v844
        %v1035 = vmul.f32 %v587, %v1034
        %v1036 = vmul.f32 %v589, %v1034
        %v1037 = vrcp.pop %v847
        %v1038 = vmul.f32 %v591, %v1037
        %v1039 = vmul.f32 %v593, %v1037
        %v1040 = vrcp.pop %v850
        %v1041 = vmul.f32 %v595, %v1040
        %v1042 = vmul.f32 %v597, %v1040
        %v1043 = vrcp.pop %v853
        %v1044 = vmul.f32 %v599, %v1043
        %v1045 = vmul.f32 %v601, %v1043
        %v1046 = vrcp.pop %v856
        %v1047 = vmul.f32 %v603, %v1046
        %v1048 = vmul.f32 %v605, %v1046
        %v1049 = vrcp.pop %v859
        %v1050 = vmul.f32 %v607, %v1049
        %v1051 = vmul.f32 %v609, %v1049
        %v1052 = vrcp.pop %v862
        %v1053 = vmul.f32 %v611, %v1052
        %v1054 = vmul.f32 %v613, %v1052
        %v1055 = vrcp.pop %v865
        %v1056 = vmul.f32 %v615, %v1055
        %v1057 = vmul.f32 %v617, %v1055
        %v1058 = vrcp.pop %v868
        %v1059 = vmul.f32 %v619, %v1058
        %v1060 = vmul.f32 %v621, %v1058
        %v1061 = vrcp.pop %v871
        %v1062 = vmul.f32 %v623, %v1061
        %v1063 = vmul.f32 %v625, %v1061
        %v1064 = vrcp.pop %v874
        %v1065 = vmul.f32 %v627, %v1064
        %v1066 = vmul.f32 %v629, %v1064
        %v1067 = vrcp.pop %v877
        %v1068 = vmul.f32 %v631, %v1067
        %v1069 = vmul.f32 %v633, %v1067
        %v1070 = vrcp.pop %v880
        %v1071 = vmul.f32 %v635, %v1070
        %v1072 = vmul.f32 %v637, %v1070
        %v1073 = vrcp.pop %v883
        %v1074 = vmul.f32 %v639, %v1073
        %v1075 = vmul.f32 %v641, %v1073
        %v1076 = vrcp.pop %v886
        %v1077 = vmul.f32 %v643, %v1076
        %v1078 = vmul.f32 %v645, %v1076
        %v1079 = vrcp.pop %v889
        %v1080 = vmul.f32 %v647, %v1079
        %v1081 = vmul.f32 %v649, %v1079
        %v1082 = vrcp.pop %v892
        %v1083 = vmul.f32 %v651, %v1082
        %v1084 = vmul.f32 %v653, %v1082
        %v1085 = vrcp.pop %v895
        %v1086 = vmul.f32 %v655, %v1085
        %v1087 = vmul.f32 %v657, %v1085
        %v1088 = vrcp.pop %v898
        %v1089 = vmul.f32 %v659, %v1088
        %v1090 = vmul.f32 %v661, %v1088
        %v1091 = vrcp.pop %v901
        %v1092 = vmul.f32 %v663, %v1091
        %v1093 = vmul.f32 %v665, %v1091
        %v1094 = vrcp.pop %v904
        %v1095 = vmul.f32 %v667, %v1094
        %v1096 = vmul.f32 %v669, %v1094
        %v1097 = vrcp.pop %v907
        %v1098 = vmul.f32 %v671, %v1097
        %v1099 = vmul.f32 %v673, %v1097
        %v1100 = vrcp.pop %v910
        %v1101 = vmul.f32 %v675, %v1100
        %v1102 = vmul.f32 %v677, %v1100
        %v1103 = vrcp.pop %v913
        %v1104 = vmul.f32 %v679, %v1103
        %v1105 = vmul.f32 %v681, %v1103
        %v1106 = vrcp.pop %v916
        %v1107 = vmul.f32 %v683, %v1106
        %v1108 = vmul.f32 %v685, %v1106
        %v1109 = vrcp.pop %v919
        %v1110 = vmul.f32 %v687, %v1109
        %v1111 = vmul.f32 %v689, %v1109
        %v1112 = vrcp.pop %v922
        %v1113 = vmul.f32 %v691, %v1112
        %v1114 = vmul.f32 %v693, %v1112
        %v1115 = vrcp.pop %v925
        %v1116 = vmul.f32 %v695, %v1115
        %v1117 = vmul.f32 %v697, %v1115
        %v1118 = vrcp.pop %v928
        %v1119 = vmul.f32 %v699, %v1118
        %v1120 = vmul.f32 %v701, %v1118
        %v1121 = vrcp.pop %v931
        %v1122 = vmul.f32 %v703, %v1121
        %v1123 = vmul.f32 %v705, %v1121
        %v1124 = vrcp.pop %v934
        %v1125 = vmul.f32 %v707, %v1124
        %v1126 = vmul.f32 %v709, %v1124
        %v1127 = vrcp.pop %v937
        %v1128 = vmul.f32 %v711, %v1127
        %v1129 = vmul.f32 %v713, %v1127
        %v1130 = vrcp.pop %v940
        %v1131 = vmul.f32 %v715, %v1130
        %v1132 = vmul.f32 %v717, %v1130
        %v1133 = vrcp.pop %v943
        %v1134 = vmul.f32 %v719, %v1133
        %v1135 = vmul.f32 %v721, %v1133
        %v1136 = vrcp.pop %v946
        %v1137 = vmul.f32 %v723, %v1136
        %v1138 = vmul.f32 %v725, %v1136
        %v1139 = vrcp.pop %v949
        %v1140 = vmul.f32 %v727, %v1139
        %v1141 = vmul.f32 %v729, %v1139
        %v1142 = vrcp.pop %v952
        %v1143 = vmul.f32 %v731, %v1142
        %v1144 = vmul.f32 %v733, %v1142
        %v1145 = vrcp.pop %v955
        %v1146 = vmul.f32 %v735, %v1145
        %v1147 = vmul.f32 %v737, %v1145
        %v1148 = vrcp.pop %v958
        %v1149 = vmul.f32 %v739, %v1148
        %v1150 = vmul.f32 %v741, %v1148
        %v1151 = vrcp.pop %v961
        %v1152 = vmul.f32 %v743, %v1151
        %v1153 = vmul.f32 %v745, %v1151
        %v1154 = vrcp.pop %v964
        %v1155 = vmul.f32 %v747, %v1154
        %v1156 = vmul.f32 %v749, %v1154
        %v1157 = vrcp.pop %v967
        %v1158 = vmul.f32 %v751, %v1157
        %v1159 = vmul.f32 %v753, %v1157
        %v1160 = vrcp.pop %v970
        %v1161 = vmul.f32 %v755, %v1160
        %v1162 = vmul.f32 %v757, %v1160
        %v1163 = vrcp.pop %v973
        %v1164 = vmul.f32 %v759, %v1163
        %v1165 = vmul.f32 %v761, %v1163
        %v1166 = vrcp.pop %v976
        %v1167 = vmul.f32 %v763, %v1166
        %v1168 = vmul.f32 %v765, %v1166
        %v1169 = vrcp.pop %v979
        %v1170 = vmul.f32 %v767, %v1169
        %v1171 = vmul.f32 %v769, %v1169
        %v1172 = vrcp.pop %v982
        %v1173 = vmul.f32 %v771, %v1172
        %v1174 = vmul.f32 %v773, %v1172
        %v1175 = vrcp.pop %v985
        %v1176 = vmul.f32 %v775, %v1175
        %v1177 = vmul.f32 %v777, %v1175
        %v1178 = vrcp.pop %v988
        %v1179 = vmul.f32 %v779, %v1178
        %v1180 = vmul.f32 %v781, %v1178
        %v1181 = vrcp.pop %v991
        %v1182 = vmul.f32 %v783, %v1181
        %v1183 = vmul.f32 %v785, %v1181
        %v1184 = vrcp.pop %v994
        %v1185 = vmul.f32 %v787, %v1184
        %v1186 = vmul.f32 %v789, %v1184
        %v1187 = vrcp.pop %v997
        %v1188 = vmul.f32 %v791, %v1187
        %v1189 = vmul.f32 %v793, %v1187
        %v1190 = vrcp.pop %v1000
        %v1191 = vmul.f32 %v795, %v1190
        %v1192 = vmul.f32 %v797, %v1190
        %v1193 = vrcp.pop %v1003
        %v1194 = vmul.f32 %v799, %v1193
        %v1195 = vmul.f32 %v801, %v1193
        %v1196 = vrcp.pop %v1006
        %v1197 = vmul.f32 %v803, %v1196
        %v1198 = vmul.f32 %v805, %v1196
        %v1199 = vrcp.pop %v1009
        %v1200 = vmul.f32 %v807, %v1199
        %v1201 = vmul.f32 %v809, %v1199
        %v1202 = vrcp.pop %v1012
        %v1203 = vmul.f32 %v811, %v1202
        %v1204 = vmul.f32 %v813, %v1202
        %v1205 = vrcp.pop %v1015
        %v1206 = vmul.f32 %v815, %v1205
        %v1207 = vmul.f32 %v817, %v1205
        %v1208 = vrcp.pop %v1018
        %v1209 = vmul.f32 %v819, %v1208
        %v1210 = vmul.f32 %v821, %v1208
        %v1211 = vrcp.pop %v1021
        %v1212 = vmul.f32 %v823, %v1211
        %v1213 = vmul.f32 %v825, %v1211
        %v1214 = vrcp.pop %v1024
        %v1215 = vmul.f32 %v827, %v1214
        %v1216 = vmul.f32 %v829, %v1214
        %v1217 = vrcp.pop %v1027
        %v1218 = vmul.f32 %v831, %v1217
        %v1219 = vmul.f32 %v833, %v1217
        %v1220 = vrcp.pop %v1030
        %v1221 = vmul.f32 %v835, %v1220
        %v1222 = vmul.f32 %v837, %v1220
        %v1223 = vrcp.pop %v1033
        %v1224 = vmul.f32 %v839, %v1223
        %v1225 = vmul.f32 %v841, %v1223
        %1226 = vst [vmem:[%s135] sm:$0xff] %v1035
        %1227 = vst [vmem:[%s135 + $0x8] sm:$0xff] %v1036
        %1228 = vst [vmem:[%s135 + $0x10] sm:$0xff] %v1038
        %1229 = vst [vmem:[%s135 + $0x18] sm:$0xff] %v1039
        %1230 = vst [vmem:[%s135 + $0x20] sm:$0xff] %v1041
        %1231 = vst [vmem:[%s135 + $0x28] sm:$0xff] %v1042
        %1232 = vst [vmem:[%s135 + $0x30] sm:$0xff] %v1044
        %1233 = vst [vmem:[%s135 + $0x38] sm:$0xff] %v1045
        %1234 = vst [vmem:[%s135 + $0x40] sm:$0xff] %v1047
        %1235 = vst [vmem:[%s135 + $0x48] sm:$0xff] %v1048
        %1236 = vst [vmem:[%s135 + $0x50] sm:$0xff] %v1050
        %1237 = vst [vmem:[%s135 + $0x58] sm:$0xff] %v1051
        %1238 = vst [vmem:[%s135 + $0x60] sm:$0xff] %v1053
        %1239 = vst [vmem:[%s135 + $0x68] sm:$0xff] %v1054
        %1240 = vst [vmem:[%s135 + $0x70] sm:$0xff] %v1056
        %1241 = vst [vmem:[%s135 + $0x78] sm:$0xff] %v1057
        %1242 = vst [vmem:[%s135 + $0x80] sm:$0xff] %v1059
        %1243 = vst [vmem:[%s135 + $0x88] sm:$0xff] %v1060
        %1244 = vst [vmem:[%s135 + $0x90] sm:$0xff] %v1062
        %1245 = vst [vmem:[%s135 + $0x98] sm:$0xff] %v1063
        %1246 = vst [vmem:[%s135 + $0xa0] sm:$0xff] %v1065
        %1247 = vst [vmem:[%s135 + $0xa8] sm:$0xff] %v1066
        %1248 = vst [vmem:[%s135 + $0xb0] sm:$0xff] %v1068
        %1249 = vst [vmem:[%s135 + $0xb8] sm:$0xff] %v1069
        %1250 = vst [vmem:[%s135 + $0xc0] sm:$0xff] %v1071
        %1251 = vst [vmem:[%s135 + $0xc8] sm:$0xff] %v1072
        %1252 = vst [vmem:[%s135 + $0xd0] sm:$0xff] %v1074
        %1253 = vst [vmem:[%s135 + $0xd8] sm:$0xff] %v1075
        %1254 = vst [vmem:[%s135 + $0xe0] sm:$0xff] %v1077
        %1255 = vst [vmem:[%s135 + $0xe8] sm:$0xff] %v1078
        %1256 = vst [vmem:[%s135 + $0xf0] sm:$0xff] %v1080
        %1257 = vst [vmem:[%s135 + $0xf8] sm:$0xff] %v1081
        %1258 = vst [vmem:[%s135 + $0x100] sm:$0xff] %v1083
        %1259 = vst [vmem:[%s135 + $0x108] sm:$0xff] %v1084
        %1260 = vst [vmem:[%s135 + $0x110] sm:$0xff] %v1086
        %1261 = vst [vmem:[%s135 + $0x118] sm:$0xff] %v1087
        %1262 = vst [vmem:[%s135 + $0x120] sm:$0xff] %v1089
        %1263 = vst [vmem:[%s135 + $0x128] sm:$0xff] %v1090
        %1264 = vst [vmem:[%s135 + $0x130] sm:$0xff] %v1092
        %1265 = vst [vmem:[%s135 + $0x138] sm:$0xff] %v1093
        %1266 = vst [vmem:[%s135 + $0x140] sm:$0xff] %v1095
        %1267 = vst [vmem:[%s135 + $0x148] sm:$0xff] %v1096
        %1268 = vst [vmem:[%s135 + $0x150] sm:$0xff] %v1098
        %1269 = vst [vmem:[%s135 + $0x158] sm:$0xff] %v1099
        %1270 = vst [vmem:[%s135 + $0x160] sm:$0xff] %v1101
        %1271 = vst [vmem:[%s135 + $0x168] sm:$0xff] %v1102
        %1272 = vst [vmem:[%s135 + $0x170] sm:$0xff] %v1104
        %1273 = vst [vmem:[%s135 + $0x178] sm:$0xff] %v1105
        %1274 = vst [vmem:[%s135 + $0x180] sm:$0xff] %v1107
        %1275 = vst [vmem:[%s135 + $0x188] sm:$0xff] %v1108
        %1276 = vst [vmem:[%s135 + $0x190] sm:$0xff] %v1110
        %1277 = vst [vmem:[%s135 + $0x198] sm:$0xff] %v1111
        %1278 = vst [vmem:[%s135 + $0x1a0] sm:$0xff] %v1113
        %1279 = vst [vmem:[%s135 + $0x1a8] sm:$0xff] %v1114
        %1280 = vst [vmem:[%s135 + $0x1b0] sm:$0xff] %v1116
        %1281 = vst [vmem:[%s135 + $0x1b8] sm:$0xff] %v1117
        %1282 = vst [vmem:[%s135 + $0x1c0] sm:$0xff] %v1119
        %1283 = vst [vmem:[%s135 + $0x1c8] sm:$0xff] %v1120
        %1284 = vst [vmem:[%s135 + $0x1d0] sm:$0xff] %v1122
        %1285 = vst [vmem:[%s135 + $0x1d8] sm:$0xff] %v1123
        %1286 = vst [vmem:[%s135 + $0x1e0] sm:$0xff] %v1125
        %1287 = vst [vmem:[%s135 + $0x1e8] sm:$0xff] %v1126
        %1288 = vst [vmem:[%s135 + $0x1f0] sm:$0xff] %v1128
        %1289 = vst [vmem:[%s135 + $0x1f8] sm:$0xff] %v1129
        %1290 = vst [vmem:[%s135 + $0x200] sm:$0xff] %v1131
        %1291 = vst [vmem:[%s135 + $0x208] sm:$0xff] %v1132
        %1292 = vst [vmem:[%s135 + $0x210] sm:$0xff] %v1134
        %1293 = vst [vmem:[%s135 + $0x218] sm:$0xff] %v1135
        %1294 = vst [vmem:[%s135 + $0x220] sm:$0xff] %v1137
        %1295 = vst [vmem:[%s135 + $0x228] sm:$0xff] %v1138
        %1296 = vst [vmem:[%s135 + $0x230] sm:$0xff] %v1140
        %1297 = vst [vmem:[%s135 + $0x238] sm:$0xff] %v1141
        %1298 = vst [vmem:[%s135 + $0x240] sm:$0xff] %v1143
        %1299 = vst [vmem:[%s135 + $0x248] sm:$0xff] %v1144
        %1300 = vst [vmem:[%s135 + $0x250] sm:$0xff] %v1146
        %1301 = vst [vmem:[%s135 + $0x258] sm:$0xff] %v1147
        %1302 = vst [vmem:[%s135 + $0x260] sm:$0xff] %v1149
        %1303 = vst [vmem:[%s135 + $0x268] sm:$0xff] %v1150
        %1304 = vst [vmem:[%s135 + $0x270] sm:$0xff] %v1152
        %1305 = vst [vmem:[%s135 + $0x278] sm:$0xff] %v1153
        %1306 = vst [vmem:[%s135 + $0x280] sm:$0xff] %v1155
        %1307 = vst [vmem:[%s135 + $0x288] sm:$0xff] %v1156
        %1308 = vst [vmem:[%s135 + $0x290] sm:$0xff] %v1158
        %1309 = vst [vmem:[%s135 + $0x298] sm:$0xff] %v1159
        %1310 = vst [vmem:[%s135 + $0x2a0] sm:$0xff] %v1161
        %1311 = vst [vmem:[%s135 + $0x2a8] sm:$0xff] %v1162
        %1312 = vst [vmem:[%s135 + $0x2b0] sm:$0xff] %v1164
        %1313 = vst [vmem:[%s135 + $0x2b8] sm:$0xff] %v1165
        %1314 = vst [vmem:[%s135 + $0x2c0] sm:$0xff] %v1167
        %1315 = vst [vmem:[%s135 + $0x2c8] sm:$0xff] %v1168
        %1316 = vst [vmem:[%s135 + $0x2d0] sm:$0xff] %v1170
        %1317 = vst [vmem:[%s135 + $0x2d8] sm:$0xff] %v1171
        %1318 = vst [vmem:[%s135 + $0x2e0] sm:$0xff] %v1173
        %1319 = vst [vmem:[%s135 + $0x2e8] sm:$0xff] %v1174
        %1320 = vst [vmem:[%s135 + $0x2f0] sm:$0xff] %v1176
        %1321 = vst [vmem:[%s135 + $0x2f8] sm:$0xff] %v1177
        %1322 = vst [vmem:[%s135 + $0x300] sm:$0xff] %v1179
        %1323 = vst [vmem:[%s135 + $0x308] sm:$0xff] %v1180
        %1324 = vst [vmem:[%s135 + $0x310] sm:$0xff] %v1182
        %1325 = vst [vmem:[%s135 + $0x318] sm:$0xff] %v1183
        %1326 = vst [vmem:[%s135 + $0x320] sm:$0xff] %v1185
        %1327 = vst [vmem:[%s135 + $0x328] sm:$0xff] %v1186
        %1328 = vst [vmem:[%s135 + $0x330] sm:$0xff] %v1188
        %1329 = vst [vmem:[%s135 + $0x338] sm:$0xff] %v1189
        %1330 = vst [vmem:[%s135 + $0x340] sm:$0xff] %v1191
        %1331 = vst [vmem:[%s135 + $0x348] sm:$0xff] %v1192
        %1332 = vst [vmem:[%s135 + $0x350] sm:$0xff] %v1194
        %1333 = vst [vmem:[%s135 + $0x358] sm:$0xff] %v1195
        %1334 = vst [vmem:[%s135 + $0x360] sm:$0xff] %v1197
        %1335 = vst [vmem:[%s135 + $0x368] sm:$0xff] %v1198
        %1336 = vst [vmem:[%s135 + $0x370] sm:$0xff] %v1200
        %1337 = vst [vmem:[%s135 + $0x378] sm:$0xff] %v1201
        %1338 = vst [vmem:[%s135 + $0x380] sm:$0xff] %v1203
        %1339 = vst [vmem:[%s135 + $0x388] sm:$0xff] %v1204
        %1340 = vst [vmem:[%s135 + $0x390] sm:$0xff] %v1206
        %1341 = vst [vmem:[%s135 + $0x398] sm:$0xff] %v1207
        %1342 = vst [vmem:[%s135 + $0x3a0] sm:$0xff] %v1209
        %1343 = vst [vmem:[%s135 + $0x3a8] sm:$0xff] %v1210
        %1344 = vst [vmem:[%s135 + $0x3b0] sm:$0xff] %v1212
        %1345 = vst [vmem:[%s135 + $0x3b8] sm:$0xff] %v1213
        %1346 = vst [vmem:[%s135 + $0x3c0] sm:$0xff] %v1215
        %1347 = vst [vmem:[%s135 + $0x3c8] sm:$0xff] %v1216
        %1348 = vst [vmem:[%s135 + $0x3d0] sm:$0xff] %v1218
        %1349 = vst [vmem:[%s135 + $0x3d8] sm:$0xff] %v1219
        %1350 = vst [vmem:[%s135 + $0x3e0] sm:$0xff] %v1221
        %1351 = vst [vmem:[%s135 + $0x3e8] sm:$0xff] %v1222
        %1352 = vst [vmem:[%s135 + $0x3f0] sm:$0xff] %v1224
        %1353 = vst [vmem:[%s135 + $0x3f8] sm:$0xff] %v1225
        %s1354 = sand.u32 %s52, 1
        %s1355 = scalar_lea.sflag [#allocation4], %s1354
        %s1356 = sand.u32 %s52, 1
        %s1357 = smul.addr %s1356, 1024
        %s1358 = scalar_lea.vmem [#allocation5], %s1357
        // Predicated region
        $region29: #{tpu_custom_call.1} parent=23 // pred_check
          %p1359 = pneg %p62
        $region30: #{tpu_custom_call.1} parent=23 // pred_check_branch
          %1361 = sbr.rel (%p1359) target = $region32
        $region31: #{tpu_custom_call.1} parent=23 // pred_region
          %s1362 = smul.u32 64, %s18
          %s1364 = ssub.s32 16384, 16384
          %1365 = vsyncadd %s1355, %s1364
          %s1366 = smul.addr %s1362, 2
          %s1367 = smul.addr %s1366, 128
          %s1368 = scalar_lea.hbm %s1, %s1367
          %s1369 = sshll.u32 %s1358, 4
          %s1370 = int_to_ptr.vmem [resolvable:$true] %s1369
          %1375 = dma.vmem_to_hbm [thread:$0]  %s1370, 16384, %s1368, %s1355, 256, 256, 16
        $region32: #{tpu_custom_call.1} parent=23 // pred_fallthru
          _
      $region24: #{tpu_custom_call.1} parent=5 // pred_fallthru
        _
      %p1376 = scmp.le.s32.totalorder 2, %s13
      // Predicated region
      $region33: #{tpu_custom_call.1} parent=5 // pred_check
        %p1377 = pneg %p1376
      $region34: #{tpu_custom_call.1} parent=5 // pred_check_branch
        %1379 = sbr.rel (%p1377) target = $region36
      $region35: #{tpu_custom_call.1} parent=5 // pred_region
        %s1380 = ssub.s32 %s13, 2
        // Predicated region
        $region37: #{tpu_custom_call.1} parent=35 // pred_check
          %p1381 = pneg %p68
        $region38: #{tpu_custom_call.1} parent=35 // pred_check_branch
          %1383 = sbr.rel (%p1381) target = $region40
        $region39: #{tpu_custom_call.1} parent=35 // pred_region
          %s1384 = sand.u32 %s53, 1
          %s1385 = scalar_lea.sflag [#allocation4], %s1384
          %s1386 = sand.u32 %s53, 1
          %s1387 = smul.addr %s1386, 1024
          %s1388 = scalar_lea.vmem [#allocation5], %s1387
          %1389 = dma.done %s1385, 16384
        $region40: #{tpu_custom_call.1} parent=35 // pred_fallthru
          _
      $region36: #{tpu_custom_call.1} parent=5 // pred_fallthru
        _
    $region6: #{tpu_custom_call.1} parent=1 // loop_footer
      %s17 = sadd.s32 1, %s13
    $region7: #{tpu_custom_call.1} parent=1 // loop_footer_branch
      %12 = sbr.rel target = $region3
    $region8: #{tpu_custom_call.1} parent=1 // loop_exit
      _
    %1390 = vsyncpa [#allocation3], 1
    %s1391 = scalar_lea.sflag [#allocation3], 1
    %1392 = vsyncpa %s1391, 1
    %1393 = vsyncpa [#allocation4], 1
    %s1394 = scalar_lea.sflag [#allocation4], 1
    %1395 = vsyncpa %s1394, 1

</llo_original>
